<compile_context>
chip_gen: v5e
topology: v5e:2x2
jax: 0.10.0
libtpu: 0.0.40
codegen_flags: <defaults>
</compile_context>

<pallas_src>
import jax
import jax.numpy as jnp
from jax.experimental import pallas as pl
from jax.experimental.pallas import tpu as pltpu


def _dma_copy_kernel(w_hbm_ref, o_hbm_ref, sem):
    # Single HBM->HBM DMA of the whole array. The DMA engine hits the HBM
    # roofline on its own; staging through VMEM/vregs would only add cost.
    cp = pltpu.make_async_copy(w_hbm_ref, o_hbm_ref, sem)
    cp.start()
    cp.wait()


def synthesized_image_forward(weight: jax.Array, *, materialize: bool = False) -> jax.Array:
    """Pallas equivalent of SynthesizedImage.forward().

    Default (materialize=False): forward() is an identity, so return the
    parameter unchanged — zero HBM traffic, zero kernel launches.

    materialize=True: produce a fresh output buffer holding a copy of the
    weight via a single HBM->HBM DMA (roofline-speed, no VMEM usage, works for
    any shape/dtype on v5e / v6e / v7x).
    """
    if not materialize:
        return weight

    itemsize = jnp.dtype(weight.dtype).itemsize
    return pl.pallas_call(
        _dma_copy_kernel,
        out_shape=jax.ShapeDtypeStruct(weight.shape, weight.dtype),
        in_specs=[pl.BlockSpec(memory_space=pl.ANY)],
        out_specs=pl.BlockSpec(memory_space=pl.ANY),
        scratch_shapes=[pltpu.SemaphoreType.DMA(())],
        cost_estimate=pl.CostEstimate(
            flops=0,
            transcendentals=0,
            bytes_accessed=2 * weight.size * itemsize,  # read + write
        ),
    )(weight)


if __name__ == "__main__":
    # Deterministic parameter init, mirroring torch.rand(*img_shape) (uniform [0, 1)).
    img_shape = (2, 4, 16, 16)  # small NCHW image
    key = jax.random.PRNGKey(0)
    weight = jax.random.uniform(key, img_shape, dtype=jnp.float32)

    # Default path: identity, zero traffic.
    out_identity = synthesized_image_forward(weight)
    assert out_identity is weight, "default path must return the parameter itself"

    # Materializing path: exercise the HBM->HBM DMA kernel on TPU.
    out = synthesized_image_forward(weight, materialize=True)
    out = jax.block_until_ready(out)

    assert out.shape == img_shape
    assert out.dtype == jnp.float32
    assert bool(jnp.array_equal(out, weight)), "forward() must return the weight unchanged"
    print("KERNEL_OK")
</pallas_src>

<mosaic_0001>
module attributes {stable_mosaic.version = 11 : i64} {
  func.func @_dma_copy_kernel(%arg0: memref<2x4x16x16xf32, #tpu.memory_space<any>>, %arg1: memref<2x4x16x16xf32, #tpu.memory_space<any>>, %arg2: memref<!tpu.dma_semaphore, #tpu.memory_space<semaphore_mem>>) attributes {dimension_semantics = [], scalar_prefetch = 0 : i64, scratch_operands = 1 : i64, tpu.core_type = #tpu.core_type<tc>} {
    tpu.enqueue_dma source(%arg0 : memref<2x4x16x16xf32, #tpu.memory_space<any>>) target(%arg1 : memref<2x4x16x16xf32, #tpu.memory_space<any>>) target_semaphore(%arg2 : memref<!tpu.dma_semaphore, #tpu.memory_space<semaphore_mem>>)
    tpu.wait_dma2 semaphore(%arg2 : memref<!tpu.dma_semaphore, #tpu.memory_space<semaphore_mem>>) src(%arg0 : memref<2x4x16x16xf32, #tpu.memory_space<any>>) dst(%arg1 : memref<2x4x16x16xf32, #tpu.memory_space<any>>)
    return
  }
}

</mosaic_0001>

<llo_original>
// kernel: tpu_custom_call.1
$region0: #{tpu_custom_call.1}
  #allocation0 [shape = 'u32[]', space=smem, size = 0x4, offset = 0x4, fixed_abs, tag = 'smem constant byte address 0x4 - core index']
  #allocation1 [shape = 'u32[72,128]{1,0:T(1,128)}', space=vmem, size = 0x9000, scoped, tag = 'internal scratch']
  #allocation2 [shape = 's32[1]{0}', space=sflag, size = 0x4, scoped, tag = 'scratch operand']
  #allocation3 [shape = 's32[]', space=sflag, size = 0x4, offset = 0, fixed_abs, tag = 'sflag constant byte address 0x0 - dummy sync flag']
  #allocation4 [shape = 'u32[0]{0}', space=smem, size = 0, offset = 0, fixed_abs, tag = 'smem constant byte address 0x0 - null']
  %s0 = inlined_call_operand.hbm [shape: f32[2,4,16,16], index: 0, kind: input, shape index: {}]
  %s1 = inlined_call_operand.hbm [shape: f32[2,4,16,16], index: 1, kind: output, shape index: {}]
  %s2 = sld [smem:[#allocation0]]
  $region2: #{tpu_custom_call.1} parent=0
    _
  %s4 = ssub.s32 1, %s2
  %s5 = scalar_select 0, %s4, %s2
  %s7 = sshll.u32 1, 14
  %s8 = sxor.u32 4294967295, %s7
  %s10 = sshll.u32 %s0, 4
  %s11 = int_to_ptr.hbm [resolvable:$true] %s10
  %s12 = sshll.u32 %s1, 4
  %s13 = int_to_ptr.hbm [resolvable:$true] %s12
  %16 = dma.general %s11, 2048, %s13, [#allocation2], [#allocation3], [#allocation4], 0, 0
  %s17 = smul.u32 2, 4
  %s18 = smul.u32 %s17, 16
  %s19 = smul.u32 %s18, 1
  %s20 = sshll.u32 %s19, 4
  %21 = dma.done [#allocation2], %s20
  %22 = vsyncmov [#allocation2]
  %s23 = vpop.sfrf %22
  %p24 = scmp.eq.s32.totalorder %s23, 0
  %p25 = pneg %p24
  %27 = shalt.err (%p25)

</llo_original>
